<compile_context>
chip_gen: v7x
topology: tpu7x:2x2x1
jax: 0.10.0
libtpu: 0.0.40
codegen_flags: <defaults>
</compile_context>

<pallas_src>
import functools

import jax
import jax.numpy as jnp
from jax.experimental import pallas as pl
from jax.experimental.pallas import tpu as pltpu

_LANE = 128
_VMEM_LIMIT = 32 * 1024 * 1024  # request explicitly; well above what we need


def _round_up(x, m):
    return ((x + m - 1) // m) * m


def _adj_tile_target():
    """512 fits v7x (64 MiB VMEM); go bigger where VMEM allows (v5e/v6e)."""
    try:
        vmem = getattr(pltpu.get_tpu_info(), "vmem_capacity_bytes", 0)
    except Exception:  # unknown chip / interpret mode
        vmem = 0
    return 1024 if vmem >= 100 * 1024 * 1024 else 512


def _padded_n_and_tile(n, target):
    """Pad node count so the adj tile divides it exactly."""
    if n <= target:
        n_pad = _round_up(n, _LANE)
        return n_pad, n_pad
    n_pad = _round_up(n, target)
    return n_pad, target


# --------------------------------------------------------------------------
# Kernel A (small-graph fused path): out = act(A @ (X @ W) + b) per row tile
# --------------------------------------------------------------------------
def _fused_kernel(adj_ref, x_ref, w_ref, b_ref, o_ref, *, apply_relu):
    h0 = jnp.dot(x_ref[...], w_ref[...], preferred_element_type=jnp.float32)
    z = jnp.dot(
        adj_ref[...], h0.astype(jnp.bfloat16), preferred_element_type=jnp.float32
    )
    z = z + b_ref[...]
    if apply_relu:
        z = jnp.maximum(z, 0.0)
    o_ref[...] = z.astype(o_ref.dtype)


# --------------------------------------------------------------------------
# Kernel 1 (large-graph path): H0 = X @ W   (computed once per layer, bf16 out)
# --------------------------------------------------------------------------
def _xw_kernel(x_ref, w_ref, o_ref):
    o_ref[...] = jnp.dot(
        x_ref[...], w_ref[...], preferred_element_type=jnp.float32
    ).astype(o_ref.dtype)


# --------------------------------------------------------------------------
# Kernel 2 (large-graph path): out = act(A_hat @ H0 + b), (row x reduction) grid
# --------------------------------------------------------------------------
def _agg_kernel(adj_ref, h_ref, b_ref, o_ref, acc_ref, *, apply_relu):
    k = pl.program_id(1)

    @pl.when(k == 0)
    def _init():
        acc_ref[...] = jnp.zeros_like(acc_ref)

    # Pure MXU accumulate in the inner loop (bf16 inputs, f32 accumulation).
    acc_ref[...] += jnp.dot(
        adj_ref[...], h_ref[...], preferred_element_type=jnp.float32
    )

    @pl.when(k == pl.num_programs(1) - 1)
    def _finalize():
        z = acc_ref[...] + b_ref[...]
        if apply_relu:
            z = jnp.maximum(z, 0.0)
        o_ref[...] = z.astype(o_ref.dtype)


def gcn_layer(adj_bf16, x, w, b, *, apply_relu, tm, tk):
    """One GraphConv layer: act(adj @ (x @ w) + b). All shapes pre-padded."""
    n_pad = adj_bf16.shape[0]
    f_in = x.shape[1]
    f_out = w.shape[1]

    # --- Small-graph fused path: single kernel, no intermediate H0 in HBM ---
    if n_pad == tk:
        kernel = functools.partial(_fused_kernel, apply_relu=apply_relu)
        return pl.pallas_call(
            kernel,
            out_shape=jax.ShapeDtypeStruct((n_pad, f_out), jnp.float32),
            grid=(n_pad // tm,),
            in_specs=[
                pl.BlockSpec((tm, n_pad), lambda i: (i, 0)),    # adj row tile (bf16)
                pl.BlockSpec((n_pad, f_in), lambda i: (0, 0)),  # full X
                pl.BlockSpec((f_in, f_out), lambda i: (0, 0)),  # full W
                pl.BlockSpec((1, f_out), lambda i: (0, 0)),     # bias
            ],
            out_specs=pl.BlockSpec((tm, f_out), lambda i: (i, 0)),
            compiler_params=pltpu.CompilerParams(
                dimension_semantics=("parallel",),
                vmem_limit_bytes=_VMEM_LIMIT,
            ),
        )(adj_bf16, x, w, b)

    # --- H0 = X @ W (once), streamed to the aggregation as bf16 -------------
    h0 = pl.pallas_call(
        _xw_kernel,
        out_shape=jax.ShapeDtypeStruct((n_pad, f_out), jnp.bfloat16),
        grid=(n_pad // tm,),
        in_specs=[
            pl.BlockSpec((tm, f_in), lambda i: (i, 0)),
            pl.BlockSpec((f_in, f_out), lambda i: (0, 0)),
        ],
        out_specs=pl.BlockSpec((tm, f_out), lambda i: (i, 0)),
        compiler_params=pltpu.CompilerParams(
            dimension_semantics=("parallel",),
            vmem_limit_bytes=_VMEM_LIMIT,
        ),
    )(x, w)

    # --- out = act(A_hat @ H0 + b), tiled reduction over adj columns --------
    kernel = functools.partial(_agg_kernel, apply_relu=apply_relu)
    return pl.pallas_call(
        kernel,
        out_shape=jax.ShapeDtypeStruct((n_pad, f_out), jnp.float32),
        grid=(n_pad // tm, n_pad // tk),
        in_specs=[
            pl.BlockSpec((tm, tk), lambda i, k: (i, k)),      # adj tile (bf16)
            pl.BlockSpec((tk, f_out), lambda i, k: (k, 0)),   # H0 row block
            pl.BlockSpec((1, f_out), lambda i, k: (0, 0)),    # bias
        ],
        out_specs=pl.BlockSpec((tm, f_out), lambda i, k: (i, 0)),
        scratch_shapes=[pltpu.VMEM((tm, f_out), jnp.float32)],
        compiler_params=pltpu.CompilerParams(
            dimension_semantics=("parallel", "arbitrary"),
            vmem_limit_bytes=_VMEM_LIMIT,
        ),
    )(adj_bf16, h0, b)


def encoder_forward(adj, features, params):
    """Encoder.forward: run the GCN stack. Dropout is identity (eval mode)."""
    # TODO(synk): training-mode dropout between layers not implemented
    # (nn.Dropout is identity at inference).
    # TODO(synk): for structured graphs (e.g. ring + self loops) the dense
    # A@H could be replaced by a pltpu.roll stencil (O(N*F) instead of O(N^2*F)).
    n = features.shape[0]
    n_pad, tile = _padded_n_and_tile(n, _adj_tile_target())
    tm = tk = tile

    # Zero-pad: nodes -> n_pad, feature dims -> multiples of 128. Padded
    # rows/cols are all-zero so they contribute nothing to the real outputs.
    adj_p = jnp.zeros((n_pad, n_pad), jnp.bfloat16)
    adj_p = adj_p.at[:n, :n].set(adj.astype(jnp.bfloat16))

    f_in = features.shape[1]
    f_in_pad = _round_up(f_in, _LANE)
    h = jnp.zeros((n_pad, f_in_pad), jnp.float32)
    h = h.at[:n, :f_in].set(features.astype(jnp.float32))

    n_layers_total = len(params)
    for i, (w, b) in enumerate(params):
        fi, fo = w.shape
        fi_pad = _round_up(fi, _LANE)
        fo_pad = _round_up(fo, _LANE)
        w_p = jnp.zeros((fi_pad, fo_pad), jnp.float32).at[:fi, :fo].set(w)
        b_p = jnp.zeros((1, fo_pad), jnp.float32).at[:, :fo].set(b)
        apply_relu = i < n_layers_total - 1  # activation on all but output layer
        h = gcn_layer(adj_p, h, w_p, b_p, apply_relu=apply_relu, tm=tm, tk=tk)

    f_out = params[-1][0].shape[1]
    return h[:n, :f_out]


def encoder_forward_ref(adj, features, params):
    """Pure-JAX reference (f32) for a sanity check."""
    h = features
    for i, (w, b) in enumerate(params):
        z = adj @ (h @ w) + b
        h = jnp.maximum(z, 0.0) if i < len(params) - 1 else z
    return h


def build_normalized_adj(n):
    """Deterministic small graph: ring + self loops, norm='both' (D^-1/2 A D^-1/2)."""
    a = jnp.eye(n, dtype=jnp.float32)
    idx = jnp.arange(n)
    a = a.at[idx, (idx + 1) % n].set(1.0)
    a = a.at[(idx + 1) % n, idx].set(1.0)
    deg = jnp.sum(a, axis=1)
    d_inv_sqrt = 1.0 / jnp.sqrt(deg)
    return a * d_inv_sqrt[:, None] * d_inv_sqrt[None, :]


def init_params(key, in_feats, n_hidden, n_layers):
    """GCN(in_feats, n_hidden, n_hidden, n_layers, relu, dropout) parameter shapes."""
    dims = [in_feats] + [n_hidden] * n_layers + [n_hidden]
    params = []
    for li in range(len(dims) - 1):
        key, kw = jax.random.split(key)
        fan_in, fan_out = dims[li], dims[li + 1]
        limit = jnp.sqrt(6.0 / (fan_in + fan_out))  # Glorot uniform (DGL default)
        w = jax.random.uniform(kw, (fan_in, fan_out), jnp.float32, -limit, limit)
        b = jnp.zeros((1, fan_out), jnp.float32)
        params.append((w, b))
    return params


if __name__ == "__main__":
    # Small shapes consistent with the module: N nodes, in_feats, n_hidden, n_layers.
    N, IN_FEATS, N_HIDDEN, N_LAYERS = 16, 8, 32, 1

    key = jax.random.PRNGKey(0)
    k_feat, k_param = jax.random.split(key)

    features = jax.random.normal(k_feat, (N, IN_FEATS), dtype=jnp.float32)
    adj = build_normalized_adj(N)
    params = init_params(k_param, IN_FEATS, N_HIDDEN, N_LAYERS)

    fwd = jax.jit(encoder_forward)
    out = fwd(adj, features, params)
    out = jax.block_until_ready(out)
    assert out.shape == (N, N_HIDDEN) and out.dtype == jnp.float32

    # Sanity check against the pure-JAX reference (loose tol: bf16 adj/H stream).
    ref = encoder_forward_ref(adj, features, params)
    assert jnp.allclose(out, ref, atol=5e-2, rtol=5e-2), "mismatch vs reference"

    print("KERNEL_OK")
</pallas_src>

<mosaic_0001>
module attributes {stable_mosaic.version = 11 : i64} {
  func.func @_fused_kernel(%arg0: i32, %arg1: memref<128x128xbf16, #tpu.memory_space<vmem>>, %arg2: memref<128x128xf32, #tpu.memory_space<vmem>>, %arg3: memref<128x128xf32, #tpu.memory_space<vmem>>, %arg4: memref<1x128xf32, #tpu.memory_space<vmem>>, %arg5: memref<128x128xf32, #tpu.memory_space<vmem>>) attributes {dimension_semantics = [#tpu.dimension_semantics<parallel>], iteration_bounds = array<i64: 1>, scalar_prefetch = 0 : i64, scratch_operands = 0 : i64, tpu.core_type = #tpu.core_type<tc>, window_params = [{transform_indices = @transform_0, window_bounds = array<i64: 128, 128>}, {pipeline_mode = #tpu.pipeline_mode<synchronous>, transform_indices = @transform_1, window_bounds = array<i64: 128, 128>}, {pipeline_mode = #tpu.pipeline_mode<synchronous>, transform_indices = @transform_2, window_bounds = array<i64: 128, 128>}, {pipeline_mode = #tpu.pipeline_mode<synchronous>, transform_indices = @transform_3, window_bounds = array<i64: 1, 128>}, {transform_indices = @transform_4, window_bounds = array<i64: 128, 128>}]} {
    %c0 = arith.constant 0 : index
    %c0_0 = arith.constant 0 : index
    %0 = vector.load %arg2[%c0, %c0_0] : memref<128x128xf32, #tpu.memory_space<vmem>>, vector<128x128xf32>
    %c0_1 = arith.constant 0 : index
    %c0_2 = arith.constant 0 : index
    %1 = vector.load %arg3[%c0_1, %c0_2] : memref<128x128xf32, #tpu.memory_space<vmem>>, vector<128x128xf32>
    %cst = arith.constant dense<0.000000e+00> : vector<128x128xf32>
    %2 = tpu.matmul %0, %1, %cst {dimension_numbers = #tpu.dot_dimension_numbers<[1], [0], [0], [1], [0, 0, 1, 1], [], []>} : vector<128x128xf32>, vector<128x128xf32>, vector<128x128xf32> -> vector<128x128xf32>
    %c0_3 = arith.constant 0 : index
    %c0_4 = arith.constant 0 : index
    %3 = vector.load %arg1[%c0_3, %c0_4] : memref<128x128xbf16, #tpu.memory_space<vmem>>, vector<128x128xbf16>
    %4 = arith.truncf %2 : vector<128x128xf32> to vector<128x128xbf16>
    %cst_5 = arith.constant dense<0.000000e+00> : vector<128x128xf32>
    %5 = tpu.matmul %3, %4, %cst_5 {dimension_numbers = #tpu.dot_dimension_numbers<[1], [0], [0], [1], [0, 0, 1, 1], [], []>} : vector<128x128xbf16>, vector<128x128xbf16>, vector<128x128xf32> -> vector<128x128xf32>
    %c0_6 = arith.constant 0 : index
    %c0_7 = arith.constant 0 : index
    %6 = vector.load %arg4[%c0_6, %c0_7] : memref<1x128xf32, #tpu.memory_space<vmem>>, vector<1x128xf32>
    %7 = vector.broadcast %6 : vector<1x128xf32> to vector<128x128xf32>
    %8 = arith.addf %5, %7 : vector<128x128xf32>
    %cst_8 = arith.constant 0.000000e+00 : f32
    %9 = vector.broadcast %cst_8 : f32 to vector<128x128xf32>
    %10 = arith.maximumf %8, %9 : vector<128x128xf32>
    %c0_9 = arith.constant 0 : index
    %c0_10 = arith.constant 0 : index
    %11 = vector.load %arg5[%c0_9, %c0_10] : memref<128x128xf32, #tpu.memory_space<vmem>>, vector<128x128xf32>
    tpu.vector_store %arg5[%c0_9, %c0_10], %10 {strides = array<i32>} : memref<128x128xf32, #tpu.memory_space<vmem>>, vector<128x128xf32>,
    return
  }
  func.func @transform_0(%arg0: i32) -> (i32, i32) {
    %c0_i32 = arith.constant 0 : i32
    %c0_i32_0 = arith.constant 0 : i32
    return %arg0, %c0_i32 : i32, i32
  }
  func.func @transform_1(%arg0: i32) -> (i32, i32) {
    %c0_i32 = arith.constant 0 : i32
    %c0_i32_0 = arith.constant 0 : i32
    %c0_i32_1 = arith.constant 0 : i32
    return %c0_i32, %c0_i32_0 : i32, i32
  }
  func.func @transform_2(%arg0: i32) -> (i32, i32) {
    %c0_i32 = arith.constant 0 : i32
    %c0_i32_0 = arith.constant 0 : i32
    %c0_i32_1 = arith.constant 0 : i32
    return %c0_i32, %c0_i32_0 : i32, i32
  }
  func.func @transform_3(%arg0: i32) -> (i32, i32) {
    %c0_i32 = arith.constant 0 : i32
    %c0_i32_0 = arith.constant 0 : i32
    %c0_i32_1 = arith.constant 0 : i32
    return %c0_i32, %c0_i32_0 : i32, i32
  }
  func.func @transform_4(%arg0: i32) -> (i32, i32) {
    %c0_i32 = arith.constant 0 : i32
    %c0_i32_0 = arith.constant 0 : i32
    return %arg0, %c0_i32 : i32, i32
  }
}

module attributes {stable_mosaic.version = 11 : i64} {
  func.func @_fused_kernel(%arg0: i32, %arg1: memref<128x128xbf16, #tpu.memory_space<vmem>>, %arg2: memref<128x128xf32, #tpu.memory_space<vmem>>, %arg3: memref<128x128xf32, #tpu.memory_space<vmem>>, %arg4: memref<1x128xf32, #tpu.memory_space<vmem>>, %arg5: memref<128x128xf32, #tpu.memory_space<vmem>>) attributes {dimension_semantics = [#tpu.dimension_semantics<parallel>], iteration_bounds = array<i64: 1>, scalar_prefetch = 0 : i64, scratch_operands = 0 : i64, tpu.core_type = #tpu.core_type<tc>, window_params = [{transform_indices = @transform_0, window_bounds = array<i64: 128, 128>}, {pipeline_mode = #tpu.pipeline_mode<synchronous>, transform_indices = @transform_1, window_bounds = array<i64: 128, 128>}, {pipeline_mode = #tpu.pipeline_mode<synchronous>, transform_indices = @transform_2, window_bounds = array<i64: 128, 128>}, {pipeline_mode = #tpu.pipeline_mode<synchronous>, transform_indices = @transform_3, window_bounds = array<i64: 1, 128>}, {transform_indices = @transform_4, window_bounds = array<i64: 128, 128>}]} {
    %c0 = arith.constant 0 : index
    %c0_0 = arith.constant 0 : index
    %0 = vector.load %arg2[%c0, %c0_0] : memref<128x128xf32, #tpu.memory_space<vmem>>, vector<128x128xf32>
    %c0_1 = arith.constant 0 : index
    %c0_2 = arith.constant 0 : index
    %1 = vector.load %arg3[%c0_1, %c0_2] : memref<128x128xf32, #tpu.memory_space<vmem>>, vector<128x128xf32>
    %cst = arith.constant dense<0.000000e+00> : vector<128x128xf32>
    %2 = tpu.matmul %0, %1, %cst {dimension_numbers = #tpu.dot_dimension_numbers<[1], [0], [0], [1], [0, 0, 1, 1], [], []>} : vector<128x128xf32>, vector<128x128xf32>, vector<128x128xf32> -> vector<128x128xf32>
    %c0_3 = arith.constant 0 : index
    %c0_4 = arith.constant 0 : index
    %3 = vector.load %arg1[%c0_3, %c0_4] : memref<128x128xbf16, #tpu.memory_space<vmem>>, vector<128x128xbf16>
    %4 = arith.truncf %2 : vector<128x128xf32> to vector<128x128xbf16>
    %cst_5 = arith.constant dense<0.000000e+00> : vector<128x128xf32>
    %5 = tpu.matmul %3, %4, %cst_5 {dimension_numbers = #tpu.dot_dimension_numbers<[1], [0], [0], [1], [0, 0, 1, 1], [], []>} : vector<128x128xbf16>, vector<128x128xbf16>, vector<128x128xf32> -> vector<128x128xf32>
    %c0_6 = arith.constant 0 : index
    %c0_7 = arith.constant 0 : index
    %6 = vector.load %arg4[%c0_6, %c0_7] : memref<1x128xf32, #tpu.memory_space<vmem>>, vector<1x128xf32>
    %7 = vector.broadcast %6 : vector<1x128xf32> to vector<128x128xf32>
    %8 = arith.addf %5, %7 : vector<128x128xf32>
    %c0_8 = arith.constant 0 : index
    %c0_9 = arith.constant 0 : index
    %9 = vector.load %arg5[%c0_8, %c0_9] : memref<128x128xf32, #tpu.memory_space<vmem>>, vector<128x128xf32>
    tpu.vector_store %arg5[%c0_8, %c0_9], %8 {strides = array<i32>} : memref<128x128xf32, #tpu.memory_space<vmem>>, vector<128x128xf32>,
    return
  }
  func.func @transform_0(%arg0: i32) -> (i32, i32) {
    %c0_i32 = arith.constant 0 : i32
    %c0_i32_0 = arith.constant 0 : i32
    return %arg0, %c0_i32 : i32, i32
  }
  func.func @transform_1(%arg0: i32) -> (i32, i32) {
    %c0_i32 = arith.constant 0 : i32
    %c0_i32_0 = arith.constant 0 : i32
    %c0_i32_1 = arith.constant 0 : i32
    return %c0_i32, %c0_i32_0 : i32, i32
  }
  func.func @transform_2(%arg0: i32) -> (i32, i32) {
    %c0_i32 = arith.constant 0 : i32
    %c0_i32_0 = arith.constant 0 : i32
    %c0_i32_1 = arith.constant 0 : i32
    return %c0_i32, %c0_i32_0 : i32, i32
  }
  func.func @transform_3(%arg0: i32) -> (i32, i32) {
    %c0_i32 = arith.constant 0 : i32
    %c0_i32_0 = arith.constant 0 : i32
    %c0_i32_1 = arith.constant 0 : i32
    return %c0_i32, %c0_i32_0 : i32, i32
  }
  func.func @transform_4(%arg0: i32) -> (i32, i32) {
    %c0_i32 = arith.constant 0 : i32
    %c0_i32_0 = arith.constant 0 : i32
    return %arg0, %c0_i32 : i32, i32
  }
}

</mosaic_0001>

<llo_original>
// kernel: encoder_forward.2
$region0: #{encoder_forward.2}
  #allocation0 [shape = 'u32[]', space=smem, size = 0x4, offset = 0x4, fixed_abs, tag = 'smem constant byte address 0x4 - core index']
  #allocation1 [shape = 'u32[144,128]{1,0:T(1,128)}', space=vmem, size = 0x12000, scoped, tag = 'internal scratch']
  %s0 = inlined_call_operand.vmem [shape: bf16[128,128], index: 0, kind: input, shape index: {}]
  %s1 = inlined_call_operand.vmem [shape: f32[128,128], index: 1, kind: input, shape index: {}]
  %s2 = inlined_call_operand.vmem [shape: f32[128,128], index: 2, kind: input, shape index: {}]
  %s3 = inlined_call_operand.vmem [shape: f32[1,128], index: 3, kind: input, shape index: {}]
  %s4 = inlined_call_operand.vmem [shape: f32[128,128], index: 4, kind: output, shape index: {}]
  %s5 = sld [smem:[#allocation0]]
  $region26: #{encoder_forward.2} parent=0
    _
  %s7 = ssub.s32 1, %s5
  %s8 = scalar_select 0, %s7, %s5
  // Predicated region
  $region2: #{encoder_forward.2} parent=0 // pred_check
    _
  $region3: #{encoder_forward.2} parent=0 // pred_check_branch
    %10 = sbr.rel (0) target = $region5
  $region4: #{encoder_forward.2} parent=0 // pred_region
    _
  $region5: #{encoder_forward.2} parent=0 // pred_fallthru
    _
  // Predicated region
  $region6: #{encoder_forward.2} parent=0 // pred_check
    _
  $region7: #{encoder_forward.2} parent=0 // pred_check_branch
    %12 = sbr.rel (0) target = $region9
  $region8: #{encoder_forward.2} parent=0 // pred_region
    _
  $region9: #{encoder_forward.2} parent=0 // pred_fallthru
    _
  // Predicated region
  $region10: #{encoder_forward.2} parent=0 // pred_check
    _
  $region11: #{encoder_forward.2} parent=0 // pred_check_branch
    %14 = sbr.rel (0) target = $region13
  $region12: #{encoder_forward.2} parent=0 // pred_region
    _
  $region13: #{encoder_forward.2} parent=0 // pred_fallthru
    _
  // Predicated region
  $region14: #{encoder_forward.2} parent=0 // pred_check
    _
  $region15: #{encoder_forward.2} parent=0 // pred_check_branch
    %16 = sbr.rel (0) target = $region17
  $region16: #{encoder_forward.2} parent=0 // pred_region
    _
  $region17: #{encoder_forward.2} parent=0 // pred_fallthru
    _
  %v18 = vld [vmem:[%s1] sm:$0xff]
  %v19 = vld [vmem:[%s1 + $0x8] sm:$0xff]
  %v20 = vld [vmem:[%s1 + $0x10] sm:$0xff]
  %v21 = vld [vmem:[%s1 + $0x18] sm:$0xff]
  %v22 = vld [vmem:[%s1 + $0x20] sm:$0xff]
  %v23 = vld [vmem:[%s1 + $0x28] sm:$0xff]
  %v24 = vld [vmem:[%s1 + $0x30] sm:$0xff]
  %v25 = vld [vmem:[%s1 + $0x38] sm:$0xff]
  %v26 = vld [vmem:[%s1 + $0x40] sm:$0xff]
  %v27 = vld [vmem:[%s1 + $0x48] sm:$0xff]
  %v28 = vld [vmem:[%s1 + $0x50] sm:$0xff]
  %v29 = vld [vmem:[%s1 + $0x58] sm:$0xff]
  %v30 = vld [vmem:[%s1 + $0x60] sm:$0xff]
  %v31 = vld [vmem:[%s1 + $0x68] sm:$0xff]
  %v32 = vld [vmem:[%s1 + $0x70] sm:$0xff]
  %v33 = vld [vmem:[%s1 + $0x78] sm:$0xff]
  %v34 = vld [vmem:[%s2] sm:$0xff]
  %v35 = vld [vmem:[%s2 + $0x8] sm:$0xff]
  %v36 = vld [vmem:[%s2 + $0x10] sm:$0xff]
  %v37 = vld [vmem:[%s2 + $0x18] sm:$0xff]
  %v38 = vld [vmem:[%s2 + $0x20] sm:$0xff]
  %v39 = vld [vmem:[%s2 + $0x28] sm:$0xff]
  %v40 = vld [vmem:[%s2 + $0x30] sm:$0xff]
  %v41 = vld [vmem:[%s2 + $0x38] sm:$0xff]
  %v42 = vld [vmem:[%s2 + $0x40] sm:$0xff]
  %v43 = vld [vmem:[%s2 + $0x48] sm:$0xff]
  %v44 = vld [vmem:[%s2 + $0x50] sm:$0xff]
  %v45 = vld [vmem:[%s2 + $0x58] sm:$0xff]
  %v46 = vld [vmem:[%s2 + $0x60] sm:$0xff]
  %v47 = vld [vmem:[%s2 + $0x68] sm:$0xff]
  %v48 = vld [vmem:[%s2 + $0x70] sm:$0xff]
  %v49 = vld [vmem:[%s2 + $0x78] sm:$0xff]
  %50 = vmatprep.subr.mxu0 0.0
  %51 = vmatpush1.msra.mxu0 %v34
  %52 = vmatprep.subr.mxu0 0.0
  %53 = vmatpush1.msra.mxu0 %v35
  %54 = vmatprep.subr.mxu0 0.0
  %55 = vmatpush1.msra.mxu0 %v36
  %56 = vmatprep.subr.mxu0 0.0
  %57 = vmatpush1.msra.mxu0 %v37
  %58 = vmatprep.subr.mxu0 0.0
  %59 = vmatpush1.msra.mxu0 %v38
  %60 = vmatprep.subr.mxu0 0.0
  %61 = vmatpush1.msra.mxu0 %v39
  %62 = vmatprep.subr.mxu0 0.0
  %63 = vmatpush1.msra.mxu0 %v40
  %64 = vmatprep.subr.mxu0 0.0
  %65 = vmatpush1.msra.mxu0 %v41
  %66 = vmatprep.subr.mxu0 0.0
  %67 = vmatpush1.msra.mxu0 %v42
  %68 = vmatprep.subr.mxu0 0.0
  %69 = vmatpush1.msra.mxu0 %v43
  %70 = vmatprep.subr.mxu0 0.0
  %71 = vmatpush1.msra.mxu0 %v44
  %72 = vmatprep.subr.mxu0 0.0
  %73 = vmatpush1.msra.mxu0 %v45
  %74 = vmatprep.subr.mxu0 0.0
  %75 = vmatpush1.msra.mxu0 %v46
  %76 = vmatprep.subr.mxu0 0.0
  %77 = vmatpush1.msra.mxu0 %v47
  %78 = vmatprep.subr.mxu0 0.0
  %79 = vmatpush1.msra.mxu0 %v48
  %80 = vmatprep.subr.mxu0 0.0
  %81 = vmatpush1.msra.mxu0 %v49
  %82 = vmatprep.subr.mxu0 0.0
  %83 = vmatpush1.msra.mxu0 0.0
  %84 = vmatprep.subr.mxu0 0.0
  %85 = vmatpush1.msra.mxu0 0.0
  %86 = vmatprep.subr.mxu0 0.0
  %87 = vmatpush1.msra.mxu0 0.0
  %88 = vmatprep.subr.mxu0 0.0
  %89 = vmatpush1.msra.mxu0 0.0
  %90 = vmatprep.subr.mxu0 0.0
  %91 = vmatpush1.msra.mxu0 0.0
  %92 = vmatprep.subr.mxu0 0.0
  %93 = vmatpush1.msra.mxu0 0.0
  %94 = vmatprep.subr.mxu0 0.0
  %95 = vmatpush1.msra.mxu0 0.0
  %96 = vmatprep.subr.mxu0 0.0
  %97 = vmatpush1.msra.mxu0 0.0
  %98 = vmatprep.subr.mxu0 0.0
  %99 = vmatpush1.msra.mxu0 0.0
  %100 = vmatprep.subr.mxu0 0.0
  %101 = vmatpush1.msra.mxu0 0.0
  %102 = vmatprep.subr.mxu0 0.0
  %103 = vmatpush1.msra.mxu0 0.0
  %104 = vmatprep.subr.mxu0 0.0
  %105 = vmatpush1.msra.mxu0 0.0
  %106 = vmatprep.subr.mxu0 0.0
  %107 = vmatpush1.msra.mxu0 0.0
  %108 = vmatprep.subr.mxu0 0.0
  %109 = vmatpush1.msra.mxu0 0.0
  %110 = vmatprep.subr.mxu0 0.0
  %111 = vmatpush1.msra.mxu0 0.0
  %112 = vmatprep.subr.mxu0 0.0
  %113 = vmatpush1.msra.mxu0 0.0
  %114 = vmatprep.mubr.f32.mxu0 0.0
  %115 = vmatmul.mubr.f32.gmra.mrb[0].mxu0 %v18
  %v116 = vpop.f32.mrb[0].mxu0
  %v117 = vadd.f32 0.0, %v116
  %v118 = vpop.f32.mrb[0].mxu0
  %119 = vmatprep.mubr.f32.mxu0 0.0
  %120 = vmatmul.mubr.f32.gmra.mrb[0].mxu0 %v19
  %v121 = vpop.f32.mrb[0].mxu0
  %v122 = vadd.f32 0.0, %v121
  %v123 = vpop.f32.mrb[0].mxu0
  %124 = vmatprep.mubr.f32.mxu0 0.0
  %125 = vmatmul.mubr.f32.gmra.mrb[0].mxu0 %v20
  %v126 = vpop.f32.mrb[0].mxu0
  %v127 = vadd.f32 0.0, %v126
  %v128 = vpop.f32.mrb[0].mxu0
  %129 = vmatprep.mubr.f32.mxu0 0.0
  %130 = vmatmul.mubr.f32.gmra.mrb[0].mxu0 %v21
  %v131 = vpop.f32.mrb[0].mxu0
  %v132 = vadd.f32 0.0, %v131
  %v133 = vpop.f32.mrb[0].mxu0
  %134 = vmatprep.mubr.f32.mxu0 0.0
  %135 = vmatmul.mubr.f32.gmra.mrb[0].mxu0 %v22
  %v136 = vpop.f32.mrb[0].mxu0
  %v137 = vadd.f32 0.0, %v136
  %v138 = vpop.f32.mrb[0].mxu0
  %139 = vmatprep.mubr.f32.mxu0 0.0
  %140 = vmatmul.mubr.f32.gmra.mrb[0].mxu0 %v23
  %v141 = vpop.f32.mrb[0].mxu0
  %v142 = vadd.f32 0.0, %v141
  %v143 = vpop.f32.mrb[0].mxu0
  %144 = vmatprep.mubr.f32.mxu0 0.0
  %145 = vmatmul.mubr.f32.gmra.mrb[0].mxu0 %v24
  %v146 = vpop.f32.mrb[0].mxu0
  %v147 = vadd.f32 0.0, %v146
  %v148 = vpop.f32.mrb[0].mxu0
  %149 = vmatprep.mubr.f32.mxu0 0.0
  %150 = vmatmul.mubr.f32.gmra.mrb[0].mxu0 %v25
  %v151 = vpop.f32.mrb[0].mxu0
  %v152 = vadd.f32 0.0, %v151
  %v153 = vpop.f32.mrb[0].mxu0
  %154 = vmatprep.mubr.f32.mxu0 0.0
  %155 = vmatmul.mubr.f32.gmra.mrb[0].mxu0 %v26
  %v156 = vpop.f32.mrb[0].mxu0
  %v157 = vadd.f32 0.0, %v156
  %v158 = vpop.f32.mrb[0].mxu0
  %159 = vmatprep.mubr.f32.mxu0 0.0
  %160 = vmatmul.mubr.f32.gmra.mrb[0].mxu0 %v27
  %v161 = vpop.f32.mrb[0].mxu0
  %v162 = vadd.f32 0.0, %v161
  %v163 = vpop.f32.mrb[0].mxu0
  %164 = vmatprep.mubr.f32.mxu0 0.0
  %165 = vmatmul.mubr.f32.gmra.mrb[0].mxu0 %v28
  %v166 = vpop.f32.mrb[0].mxu0
  %v167 = vadd.f32 0.0, %v166
  %v168 = vpop.f32.mrb[0].mxu0
  %169 = vmatprep.mubr.f32.mxu0 0.0
  %170 = vmatmul.mubr.f32.gmra.mrb[0].mxu0 %v29
  %v171 = vpop.f32.mrb[0].mxu0
  %v172 = vadd.f32 0.0, %v171
  %v173 = vpop.f32.mrb[0].mxu0
  %174 = vmatprep.mubr.f32.mxu0 0.0
  %175 = vmatmul.mubr.f32.gmra.mrb[0].mxu0 %v30
  %v176 = vpop.f32.mrb[0].mxu0
  %v177 = vadd.f32 0.0, %v176
  %v178 = vpop.f32.mrb[0].mxu0
  %179 = vmatprep.mubr.f32.mxu0 0.0
  %180 = vmatmul.mubr.f32.gmra.mrb[0].mxu0 %v31
  %v181 = vpop.f32.mrb[0].mxu0
  %v182 = vadd.f32 0.0, %v181
  %v183 = vpop.f32.mrb[0].mxu0
  %184 = vmatprep.mubr.f32.mxu0 0.0
  %185 = vmatmul.mubr.f32.gmra.mrb[0].mxu0 %v32
  %v186 = vpop.f32.mrb[0].mxu0
  %v187 = vadd.f32 0.0, %v186
  %v188 = vpop.f32.mrb[0].mxu0
  %189 = vmatprep.mubr.f32.mxu0 0.0
  %190 = vmatmul.mubr.f32.gmra.mrb[0].mxu0 %v33
  %v191 = vpop.f32.mrb[0].mxu0
  %v192 = vadd.f32 0.0, %v191
  %v193 = vpop.f32.mrb[0].mxu0
  %194 = vdwg.mxu0
  %v195 = vld [vmem:[%s0] sm:$0xf]
  %v196 = vld [vmem:[%s0 + $0x4] sm:$0xf]
  %v197 = vld [vmem:[%s0 + $0x8] sm:$0xf]
  %v198 = vld [vmem:[%s0 + $0xc] sm:$0xf]
  %v199 = vld [vmem:[%s0 + $0x10] sm:$0xf]
  %v200 = vld [vmem:[%s0 + $0x14] sm:$0xf]
  %v201 = vld [vmem:[%s0 + $0x18] sm:$0xf]
  %v202 = vld [vmem:[%s0 + $0x1c] sm:$0xf]
  %v203 = vld [vmem:[%s0 + $0x20] sm:$0xf]
  %v204 = vld [vmem:[%s0 + $0x24] sm:$0xf]
  %v205 = vld [vmem:[%s0 + $0x28] sm:$0xf]
  %v206 = vld [vmem:[%s0 + $0x2c] sm:$0xf]
  %v207 = vld [vmem:[%s0 + $0x30] sm:$0xf]
  %v208 = vld [vmem:[%s0 + $0x34] sm:$0xf]
  %v209 = vld [vmem:[%s0 + $0x38] sm:$0xf]
  %v210 = vld [vmem:[%s0 + $0x3c] sm:$0xf]
  %v211 = vpack.c.bf16 %v122, %v117
  %v212 = vpack.c.bf16 %v132, %v127
  %v213 = vpack.c.bf16 %v142, %v137
  %v214 = vpack.c.bf16 %v152, %v147
  %v215 = vpack.c.bf16 %v162, %v157
  %v216 = vpack.c.bf16 %v172, %v167
  %v217 = vpack.c.bf16 %v182, %v177
  %v218 = vpack.c.bf16 %v192, %v187
  %v219 = vld [vmem:[%s3] sm:$0x1]
  %v221 = vlaneseq
  %v222 = vshrl.u32 %v221, 7
  %v223 = vsub.s32 0, %v222
  %v224 = vrot.slane %v219, %v223
  %v242 = vunpack.c.l.b16 %v195
  %v243 = vunpack.c.l.b16 %v196
  %v244 = vunpack.c.l.b16 %v197
  %v245 = vunpack.c.l.b16 %v198
  %v246 = vunpack.c.l.b16 %v199
  %v247 = vunpack.c.l.b16 %v200
  %v248 = vunpack.c.l.b16 %v201
  %v249 = vunpack.c.l.b16 %v202
  %v250 = vunpack.c.l.b16 %v203
  %v251 = vunpack.c.l.b16 %v204
  %v252 = vunpack.c.l.b16 %v205
  %v253 = vunpack.c.l.b16 %v206
  %v254 = vunpack.c.l.b16 %v207
  %v255 = vunpack.c.l.b16 %v208
  %v256 = vunpack.c.l.b16 %v209
  %v257 = vunpack.c.l.b16 %v210
  %v258 = vpack.c.b16 %v243, %v242
  %v259 = vpack.c.b16 %v245, %v244
  %v260 = vpack.c.b16 %v247, %v246
  %v261 = vpack.c.b16 %v249, %v248
  %v262 = vpack.c.b16 %v251, %v250
  %v263 = vpack.c.b16 %v253, %v252
  %v264 = vpack.c.b16 %v255, %v254
  %v265 = vpack.c.b16 %v257, %v256
  %274 = vmatprep.subr.bf16.mxu0 0
  %275 = vmatpush1.bf16.msra.mxu0 %v211
  %276 = vmatprep.subr.bf16.mxu0 0
  %277 = vmatpush1.bf16.msra.mxu0 %v212
  %278 = vmatprep.subr.bf16.mxu0 0
  %279 = vmatpush1.bf16.msra.mxu0 %v213
  %280 = vmatprep.subr.bf16.mxu0 0
  %281 = vmatpush1.bf16.msra.mxu0 %v214
  %282 = vmatprep.subr.bf16.mxu0 0
  %283 = vmatpush1.bf16.msra.mxu0 %v215
  %284 = vmatprep.subr.bf16.mxu0 0
  %285 = vmatpush1.bf16.msra.mxu0 %v216
  %286 = vmatprep.subr.bf16.mxu0 0
  %287 = vmatpush1.bf16.msra.mxu0 %v217
  %288 = vmatprep.subr.bf16.mxu0 0
  %289 = vmatpush1.bf16.msra.mxu0 %v218
  %290 = vmatprep.subr.bf16.mxu0 0
  %291 = vmatpush1.bf16.msra.mxu0 0
  %292 = vmatprep.subr.bf16.mxu0 0
  %293 = vmatpush1.bf16.msra.mxu0 0
  %294 = vmatprep.subr.bf16.mxu0 0
  %295 = vmatpush1.bf16.msra.mxu0 0
  %296 = vmatprep.subr.bf16.mxu0 0
  %297 = vmatpush1.bf16.msra.mxu0 0
  %298 = vmatprep.subr.bf16.mxu0 0
  %299 = vmatpush1.bf16.msra.mxu0 0
  %300 = vmatprep.subr.bf16.mxu0 0
  %301 = vmatpush1.bf16.msra.mxu0 0
  %302 = vmatprep.subr.bf16.mxu0 0
  %303 = vmatpush1.bf16.msra.mxu0 0
  %304 = vmatprep.subr.bf16.mxu0 0
  %305 = vmatpush1.bf16.msra.mxu0 0
  %306 = vmatprep.mubr.bf16.mxu0 0
  %307 = vmatmul.mubr.bf16.gmra.mrb[0].mxu0 %v258
  %v308 = vpop.f32.mrb[0].mxu0
  %v309 = vadd.f32 %v224, %v308
  %v310 = vpop.f32.mrb[0].mxu0
  %v311 = vpop.f32.mrb[0].mxu0
  %v312 = vadd.f32 %v224, %v311
  %v313 = vpop.f32.mrb[0].mxu0
  %314 = vmatprep.mubr.bf16.mxu0 0
  %315 = vmatmul.mubr.bf16.gmra.mrb[0].mxu0 %v259
  %v316 = vpop.f32.mrb[0].mxu0
  %v317 = vadd.f32 %v224, %v316
  %v318 = vpop.f32.mrb[0].mxu0
  %v319 = vpop.f32.mrb[0].mxu0
  %v320 = vadd.f32 %v224, %v319
  %v321 = vpop.f32.mrb[0].mxu0
  %322 = vmatprep.mubr.bf16.mxu0 0
  %323 = vmatmul.mubr.bf16.gmra.mrb[0].mxu0 %v260
  %v324 = vpop.f32.mrb[0].mxu0
  %v325 = vadd.f32 %v224, %v324
  %v326 = vpop.f32.mrb[0].mxu0
  %v327 = vpop.f32.mrb[0].mxu0
  %v328 = vadd.f32 %v224, %v327
  %v329 = vpop.f32.mrb[0].mxu0
  %330 = vmatprep.mubr.bf16.mxu0 0
  %331 = vmatmul.mubr.bf16.gmra.mrb[0].mxu0 %v261
  %v332 = vpop.f32.mrb[0].mxu0
  %v333 = vadd.f32 %v224, %v332
  %v334 = vpop.f32.mrb[0].mxu0
  %v335 = vpop.f32.mrb[0].mxu0
  %v336 = vadd.f32 %v224, %v335
  %v337 = vpop.f32.mrb[0].mxu0
  %338 = vmatprep.mubr.bf16.mxu0 0
  %339 = vmatmul.mubr.bf16.gmra.mrb[0].mxu0 %v262
  %v340 = vpop.f32.mrb[0].mxu0
  %v341 = vadd.f32 %v224, %v340
  %v342 = vpop.f32.mrb[0].mxu0
  %v343 = vpop.f32.mrb[0].mxu0
  %v344 = vadd.f32 %v224, %v343
  %v345 = vpop.f32.mrb[0].mxu0
  %346 = vmatprep.mubr.bf16.mxu0 0
  %347 = vmatmul.mubr.bf16.gmra.mrb[0].mxu0 %v263
  %v348 = vpop.f32.mrb[0].mxu0
  %v349 = vadd.f32 %v224, %v348
  %v350 = vpop.f32.mrb[0].mxu0
  %v351 = vpop.f32.mrb[0].mxu0
  %v352 = vadd.f32 %v224, %v351
  %v353 = vpop.f32.mrb[0].mxu0
  %354 = vmatprep.mubr.bf16.mxu0 0
  %355 = vmatmul.mubr.bf16.gmra.mrb[0].mxu0 %v264
  %v356 = vpop.f32.mrb[0].mxu0
  %v357 = vadd.f32 %v224, %v356
  %v358 = vpop.f32.mrb[0].mxu0
  %v359 = vpop.f32.mrb[0].mxu0
  %v360 = vadd.f32 %v224, %v359
  %v361 = vpop.f32.mrb[0].mxu0
  %362 = vmatprep.mubr.bf16.mxu0 0
  %363 = vmatmul.mubr.bf16.gmra.mrb[0].mxu0 %v265
  %v364 = vpop.f32.mrb[0].mxu0
  %v365 = vadd.f32 %v224, %v364
  %v366 = vpop.f32.mrb[0].mxu0
  %v367 = vpop.f32.mrb[0].mxu0
  %v368 = vadd.f32 %v224, %v367
  %v369 = vpop.f32.mrb[0].mxu0
  %370 = vdwg.mxu0
  %v371 = vmax.f32 %v309, 0.0
  %v372 = vmax.f32 %v312, 0.0
  %v373 = vmax.f32 %v317, 0.0
  %v374 = vmax.f32 %v320, 0.0
  %v375 = vmax.f32 %v325, 0.0
  %v376 = vmax.f32 %v328, 0.0
  %v377 = vmax.f32 %v333, 0.0
  %v378 = vmax.f32 %v336, 0.0
  %v379 = vmax.f32 %v341, 0.0
  %v380 = vmax.f32 %v344, 0.0
  %v381 = vmax.f32 %v349, 0.0
  %v382 = vmax.f32 %v352, 0.0
  %v383 = vmax.f32 %v357, 0.0
  %v384 = vmax.f32 %v360, 0.0
  %v385 = vmax.f32 %v365, 0.0
  %v386 = vmax.f32 %v368, 0.0
  %387 = vst [vmem:[%s4] sm:$0xff] %v371
  %388 = vst [vmem:[%s4 + $0x8] sm:$0xff] %v372
  %389 = vst [vmem:[%s4 + $0x10] sm:$0xff] %v373
  %390 = vst [vmem:[%s4 + $0x18] sm:$0xff] %v374
  %391 = vst [vmem:[%s4 + $0x20] sm:$0xff] %v375
  %392 = vst [vmem:[%s4 + $0x28] sm:$0xff] %v376
  %393 = vst [vmem:[%s4 + $0x30] sm:$0xff] %v377
  %394 = vst [vmem:[%s4 + $0x38] sm:$0xff] %v378
  %395 = vst [vmem:[%s4 + $0x40] sm:$0xff] %v379
  %396 = vst [vmem:[%s4 + $0x48] sm:$0xff] %v380
  %397 = vst [vmem:[%s4 + $0x50] sm:$0xff] %v381
  %398 = vst [vmem:[%s4 + $0x58] sm:$0xff] %v382
  %399 = vst [vmem:[%s4 + $0x60] sm:$0xff] %v383
  %400 = vst [vmem:[%s4 + $0x68] sm:$0xff] %v384
  %401 = vst [vmem:[%s4 + $0x70] sm:$0xff] %v385
  %402 = vst [vmem:[%s4 + $0x78] sm:$0xff] %v386
  // Predicated region
  $region18: #{encoder_forward.2} parent=0 // pred_check
    _
  $region19: #{encoder_forward.2} parent=0 // pred_check_branch
    %404 = sbr.rel (0) target = $region21
  $region20: #{encoder_forward.2} parent=0 // pred_region
    _
  $region21: #{encoder_forward.2} parent=0 // pred_fallthru
    _
  // Predicated region
  $region22: #{encoder_forward.2} parent=0 // pred_check
    _
  $region23: #{encoder_forward.2} parent=0 // pred_check_branch
    %406 = sbr.rel (0) target = $region25
  $region24: #{encoder_forward.2} parent=0 // pred_region
    _
  $region25: #{encoder_forward.2} parent=0 // pred_fallthru
    _

// kernel: encoder_forward.3
$region0: #{encoder_forward.3}
  #allocation0 [shape = 'u32[]', space=smem, size = 0x4, offset = 0x4, fixed_abs, tag = 'smem constant byte address 0x4 - core index']
  #allocation1 [shape = 'u32[144,128]{1,0:T(1,128)}', space=vmem, size = 0x12000, scoped, tag = 'internal scratch']
  %s0 = inlined_call_operand.vmem [shape: bf16[128,128], index: 0, kind: input, shape index: {}]
  %s1 = inlined_call_operand.vmem [shape: f32[128,128], index: 1, kind: input, shape index: {}]
  %s2 = inlined_call_operand.vmem [shape: f32[128,128], index: 2, kind: input, shape index: {}]
  %s3 = inlined_call_operand.vmem [shape: f32[1,128], index: 3, kind: input, shape index: {}]
  %s4 = inlined_call_operand.vmem [shape: f32[128,128], index: 4, kind: output, shape index: {}]
  %s5 = sld [smem:[#allocation0]]
  $region26: #{encoder_forward.3} parent=0
    _
  %s7 = ssub.s32 1, %s5
  %s8 = scalar_select 0, %s7, %s5
  // Predicated region
  $region2: #{encoder_forward.3} parent=0 // pred_check
    _
  $region3: #{encoder_forward.3} parent=0 // pred_check_branch
    %10 = sbr.rel (0) target = $region5
  $region4: #{encoder_forward.3} parent=0 // pred_region
    _
  $region5: #{encoder_forward.3} parent=0 // pred_fallthru
    _
  // Predicated region
  $region6: #{encoder_forward.3} parent=0 // pred_check
    _
  $region7: #{encoder_forward.3} parent=0 // pred_check_branch
    %12 = sbr.rel (0) target = $region9
  $region8: #{encoder_forward.3} parent=0 // pred_region
    _
  $region9: #{encoder_forward.3} parent=0 // pred_fallthru
    _
  // Predicated region
  $region10: #{encoder_forward.3} parent=0 // pred_check
    _
  $region11: #{encoder_forward.3} parent=0 // pred_check_branch
    %14 = sbr.rel (0) target = $region13
  $region12: #{encoder_forward.3} parent=0 // pred_region
    _
  $region13: #{encoder_forward.3} parent=0 // pred_fallthru
    _
  // Predicated region
  $region14: #{encoder_forward.3} parent=0 // pred_check
    _
  $region15: #{encoder_forward.3} parent=0 // pred_check_branch
    %16 = sbr.rel (0) target = $region17
  $region16: #{encoder_forward.3} parent=0 // pred_region
    _
  $region17: #{encoder_forward.3} parent=0 // pred_fallthru
    _
  %v18 = vld [vmem:[%s1] sm:$0xff]
  %v19 = vld [vmem:[%s1 + $0x8] sm:$0xff]
  %v20 = vld [vmem:[%s1 + $0x10] sm:$0xff]
  %v21 = vld [vmem:[%s1 + $0x18] sm:$0xff]
  %v22 = vld [vmem:[%s1 + $0x20] sm:$0xff]
  %v23 = vld [vmem:[%s1 + $0x28] sm:$0xff]
  %v24 = vld [vmem:[%s1 + $0x30] sm:$0xff]
  %v25 = vld [vmem:[%s1 + $0x38] sm:$0xff]
  %v26 = vld [vmem:[%s1 + $0x40] sm:$0xff]
  %v27 = vld [vmem:[%s1 + $0x48] sm:$0xff]
  %v28 = vld [vmem:[%s1 + $0x50] sm:$0xff]
  %v29 = vld [vmem:[%s1 + $0x58] sm:$0xff]
  %v30 = vld [vmem:[%s1 + $0x60] sm:$0xff]
  %v31 = vld [vmem:[%s1 + $0x68] sm:$0xff]
  %v32 = vld [vmem:[%s1 + $0x70] sm:$0xff]
  %v33 = vld [vmem:[%s1 + $0x78] sm:$0xff]
  %v34 = vld [vmem:[%s2] sm:$0xff]
  %v35 = vld [vmem:[%s2 + $0x8] sm:$0xff]
  %v36 = vld [vmem:[%s2 + $0x10] sm:$0xff]
  %v37 = vld [vmem:[%s2 + $0x18] sm:$0xff]
  %v38 = vld [vmem:[%s2 + $0x20] sm:$0xff]
  %v39 = vld [vmem:[%s2 + $0x28] sm:$0xff]
  %v40 = vld [vmem:[%s2 + $0x30] sm:$0xff]
  %v41 = vld [vmem:[%s2 + $0x38] sm:$0xff]
  %v42 = vld [vmem:[%s2 + $0x40] sm:$0xff]
  %v43 = vld [vmem:[%s2 + $0x48] sm:$0xff]
  %v44 = vld [vmem:[%s2 + $0x50] sm:$0xff]
  %v45 = vld [vmem:[%s2 + $0x58] sm:$0xff]
  %v46 = vld [vmem:[%s2 + $0x60] sm:$0xff]
  %v47 = vld [vmem:[%s2 + $0x68] sm:$0xff]
  %v48 = vld [vmem:[%s2 + $0x70] sm:$0xff]
  %v49 = vld [vmem:[%s2 + $0x78] sm:$0xff]
  %50 = vmatprep.subr.mxu0 0.0
  %51 = vmatpush1.msra.mxu0 %v34
  %52 = vmatprep.subr.mxu0 0.0
  %53 = vmatpush1.msra.mxu0 %v35
  %54 = vmatprep.subr.mxu0 0.0
  %55 = vmatpush1.msra.mxu0 %v36
  %56 = vmatprep.subr.mxu0 0.0
  %57 = vmatpush1.msra.mxu0 %v37
  %58 = vmatprep.subr.mxu0 0.0
  %59 = vmatpush1.msra.mxu0 %v38
  %60 = vmatprep.subr.mxu0 0.0
  %61 = vmatpush1.msra.mxu0 %v39
  %62 = vmatprep.subr.mxu0 0.0
  %63 = vmatpush1.msra.mxu0 %v40
  %64 = vmatprep.subr.mxu0 0.0
  %65 = vmatpush1.msra.mxu0 %v41
  %66 = vmatprep.subr.mxu0 0.0
  %67 = vmatpush1.msra.mxu0 %v42
  %68 = vmatprep.subr.mxu0 0.0
  %69 = vmatpush1.msra.mxu0 %v43
  %70 = vmatprep.subr.mxu0 0.0
  %71 = vmatpush1.msra.mxu0 %v44
  %72 = vmatprep.subr.mxu0 0.0
  %73 = vmatpush1.msra.mxu0 %v45
  %74 = vmatprep.subr.mxu0 0.0
  %75 = vmatpush1.msra.mxu0 %v46
  %76 = vmatprep.subr.mxu0 0.0
  %77 = vmatpush1.msra.mxu0 %v47
  %78 = vmatprep.subr.mxu0 0.0
  %79 = vmatpush1.msra.mxu0 %v48
  %80 = vmatprep.subr.mxu0 0.0
  %81 = vmatpush1.msra.mxu0 %v49
  %82 = vmatprep.subr.mxu0 0.0
  %83 = vmatpush1.msra.mxu0 0.0
  %84 = vmatprep.subr.mxu0 0.0
  %85 = vmatpush1.msra.mxu0 0.0
  %86 = vmatprep.subr.mxu0 0.0
  %87 = vmatpush1.msra.mxu0 0.0
  %88 = vmatprep.subr.mxu0 0.0
  %89 = vmatpush1.msra.mxu0 0.0
  %90 = vmatprep.subr.mxu0 0.0
  %91 = vmatpush1.msra.mxu0 0.0
  %92 = vmatprep.subr.mxu0 0.0
  %93 = vmatpush1.msra.mxu0 0.0
  %94 = vmatprep.subr.mxu0 0.0
  %95 = vmatpush1.msra.mxu0 0.0
  %96 = vmatprep.subr.mxu0 0.0
  %97 = vmatpush1.msra.mxu0 0.0
  %98 = vmatprep.subr.mxu0 0.0
  %99 = vmatpush1.msra.mxu0 0.0
  %100 = vmatprep.subr.mxu0 0.0
  %101 = vmatpush1.msra.mxu0 0.0
  %102 = vmatprep.subr.mxu0 0.0
  %103 = vmatpush1.msra.mxu0 0.0
  %104 = vmatprep.subr.mxu0 0.0
  %105 = vmatpush1.msra.mxu0 0.0
  %106 = vmatprep.subr.mxu0 0.0
  %107 = vmatpush1.msra.mxu0 0.0
  %108 = vmatprep.subr.mxu0 0.0
  %109 = vmatpush1.msra.mxu0 0.0
  %110 = vmatprep.subr.mxu0 0.0
  %111 = vmatpush1.msra.mxu0 0.0
  %112 = vmatprep.subr.mxu0 0.0
  %113 = vmatpush1.msra.mxu0 0.0
  %114 = vmatprep.mubr.f32.mxu0 0.0
  %115 = vmatmul.mubr.f32.gmra.mrb[0].mxu0 %v18
  %v116 = vpop.f32.mrb[0].mxu0
  %v117 = vadd.f32 0.0, %v116
  %v118 = vpop.f32.mrb[0].mxu0
  %119 = vmatprep.mubr.f32.mxu0 0.0
  %120 = vmatmul.mubr.f32.gmra.mrb[0].mxu0 %v19
  %v121 = vpop.f32.mrb[0].mxu0
  %v122 = vadd.f32 0.0, %v121
  %v123 = vpop.f32.mrb[0].mxu0
  %124 = vmatprep.mubr.f32.mxu0 0.0
  %125 = vmatmul.mubr.f32.gmra.mrb[0].mxu0 %v20
  %v126 = vpop.f32.mrb[0].mxu0
  %v127 = vadd.f32 0.0, %v126
  %v128 = vpop.f32.mrb[0].mxu0
  %129 = vmatprep.mubr.f32.mxu0 0.0
  %130 = vmatmul.mubr.f32.gmra.mrb[0].mxu0 %v21
  %v131 = vpop.f32.mrb[0].mxu0
  %v132 = vadd.f32 0.0, %v131
  %v133 = vpop.f32.mrb[0].mxu0
  %134 = vmatprep.mubr.f32.mxu0 0.0
  %135 = vmatmul.mubr.f32.gmra.mrb[0].mxu0 %v22
  %v136 = vpop.f32.mrb[0].mxu0
  %v137 = vadd.f32 0.0, %v136
  %v138 = vpop.f32.mrb[0].mxu0
  %139 = vmatprep.mubr.f32.mxu0 0.0
  %140 = vmatmul.mubr.f32.gmra.mrb[0].mxu0 %v23
  %v141 = vpop.f32.mrb[0].mxu0
  %v142 = vadd.f32 0.0, %v141
  %v143 = vpop.f32.mrb[0].mxu0
  %144 = vmatprep.mubr.f32.mxu0 0.0
  %145 = vmatmul.mubr.f32.gmra.mrb[0].mxu0 %v24
  %v146 = vpop.f32.mrb[0].mxu0
  %v147 = vadd.f32 0.0, %v146
  %v148 = vpop.f32.mrb[0].mxu0
  %149 = vmatprep.mubr.f32.mxu0 0.0
  %150 = vmatmul.mubr.f32.gmra.mrb[0].mxu0 %v25
  %v151 = vpop.f32.mrb[0].mxu0
  %v152 = vadd.f32 0.0, %v151
  %v153 = vpop.f32.mrb[0].mxu0
  %154 = vmatprep.mubr.f32.mxu0 0.0
  %155 = vmatmul.mubr.f32.gmra.mrb[0].mxu0 %v26
  %v156 = vpop.f32.mrb[0].mxu0
  %v157 = vadd.f32 0.0, %v156
  %v158 = vpop.f32.mrb[0].mxu0
  %159 = vmatprep.mubr.f32.mxu0 0.0
  %160 = vmatmul.mubr.f32.gmra.mrb[0].mxu0 %v27
  %v161 = vpop.f32.mrb[0].mxu0
  %v162 = vadd.f32 0.0, %v161
  %v163 = vpop.f32.mrb[0].mxu0
  %164 = vmatprep.mubr.f32.mxu0 0.0
  %165 = vmatmul.mubr.f32.gmra.mrb[0].mxu0 %v28
  %v166 = vpop.f32.mrb[0].mxu0
  %v167 = vadd.f32 0.0, %v166
  %v168 = vpop.f32.mrb[0].mxu0
  %169 = vmatprep.mubr.f32.mxu0 0.0
  %170 = vmatmul.mubr.f32.gmra.mrb[0].mxu0 %v29
  %v171 = vpop.f32.mrb[0].mxu0
  %v172 = vadd.f32 0.0, %v171
  %v173 = vpop.f32.mrb[0].mxu0
  %174 = vmatprep.mubr.f32.mxu0 0.0
  %175 = vmatmul.mubr.f32.gmra.mrb[0].mxu0 %v30
  %v176 = vpop.f32.mrb[0].mxu0
  %v177 = vadd.f32 0.0, %v176
  %v178 = vpop.f32.mrb[0].mxu0
  %179 = vmatprep.mubr.f32.mxu0 0.0
  %180 = vmatmul.mubr.f32.gmra.mrb[0].mxu0 %v31
  %v181 = vpop.f32.mrb[0].mxu0
  %v182 = vadd.f32 0.0, %v181
  %v183 = vpop.f32.mrb[0].mxu0
  %184 = vmatprep.mubr.f32.mxu0 0.0
  %185 = vmatmul.mubr.f32.gmra.mrb[0].mxu0 %v32
  %v186 = vpop.f32.mrb[0].mxu0
  %v187 = vadd.f32 0.0, %v186
  %v188 = vpop.f32.mrb[0].mxu0
  %189 = vmatprep.mubr.f32.mxu0 0.0
  %190 = vmatmul.mubr.f32.gmra.mrb[0].mxu0 %v33
  %v191 = vpop.f32.mrb[0].mxu0
  %v192 = vadd.f32 0.0, %v191
  %v193 = vpop.f32.mrb[0].mxu0
  %194 = vdwg.mxu0
  %v195 = vld [vmem:[%s0] sm:$0xf]
  %v196 = vld [vmem:[%s0 + $0x4] sm:$0xf]
  %v197 = vld [vmem:[%s0 + $0x8] sm:$0xf]
  %v198 = vld [vmem:[%s0 + $0xc] sm:$0xf]
  %v199 = vld [vmem:[%s0 + $0x10] sm:$0xf]
  %v200 = vld [vmem:[%s0 + $0x14] sm:$0xf]
  %v201 = vld [vmem:[%s0 + $0x18] sm:$0xf]
  %v202 = vld [vmem:[%s0 + $0x1c] sm:$0xf]
  %v203 = vld [vmem:[%s0 + $0x20] sm:$0xf]
  %v204 = vld [vmem:[%s0 + $0x24] sm:$0xf]
  %v205 = vld [vmem:[%s0 + $0x28] sm:$0xf]
  %v206 = vld [vmem:[%s0 + $0x2c] sm:$0xf]
  %v207 = vld [vmem:[%s0 + $0x30] sm:$0xf]
  %v208 = vld [vmem:[%s0 + $0x34] sm:$0xf]
  %v209 = vld [vmem:[%s0 + $0x38] sm:$0xf]
  %v210 = vld [vmem:[%s0 + $0x3c] sm:$0xf]
  %v211 = vpack.c.bf16 %v122, %v117
  %v212 = vpack.c.bf16 %v132, %v127
  %v213 = vpack.c.bf16 %v142, %v137
  %v214 = vpack.c.bf16 %v152, %v147
  %v215 = vpack.c.bf16 %v162, %v157
  %v216 = vpack.c.bf16 %v172, %v167
  %v217 = vpack.c.bf16 %v182, %v177
  %v218 = vpack.c.bf16 %v192, %v187
  %v219 = vld [vmem:[%s3] sm:$0x1]
  %v221 = vlaneseq
  %v222 = vshrl.u32 %v221, 7
  %v223 = vsub.s32 0, %v222
  %v224 = vrot.slane %v219, %v223
  %v242 = vunpack.c.l.b16 %v195
  %v243 = vunpack.c.l.b16 %v196
  %v244 = vunpack.c.l.b16 %v197
  %v245 = vunpack.c.l.b16 %v198
  %v246 = vunpack.c.l.b16 %v199
  %v247 = vunpack.c.l.b16 %v200
  %v248 = vunpack.c.l.b16 %v201
  %v249 = vunpack.c.l.b16 %v202
  %v250 = vunpack.c.l.b16 %v203
  %v251 = vunpack.c.l.b16 %v204
  %v252 = vunpack.c.l.b16 %v205
  %v253 = vunpack.c.l.b16 %v206
  %v254 = vunpack.c.l.b16 %v207
  %v255 = vunpack.c.l.b16 %v208
  %v256 = vunpack.c.l.b16 %v209
  %v257 = vunpack.c.l.b16 %v210
  %v258 = vpack.c.b16 %v243, %v242
  %v259 = vpack.c.b16 %v245, %v244
  %v260 = vpack.c.b16 %v247, %v246
  %v261 = vpack.c.b16 %v249, %v248
  %v262 = vpack.c.b16 %v251, %v250
  %v263 = vpack.c.b16 %v253, %v252
  %v264 = vpack.c.b16 %v255, %v254
  %v265 = vpack.c.b16 %v257, %v256
  %274 = vmatprep.subr.bf16.mxu0 0
  %275 = vmatpush1.bf16.msra.mxu0 %v211
  %276 = vmatprep.subr.bf16.mxu0 0
  %277 = vmatpush1.bf16.msra.mxu0 %v212
  %278 = vmatprep.subr.bf16.mxu0 0
  %279 = vmatpush1.bf16.msra.mxu0 %v213
  %280 = vmatprep.subr.bf16.mxu0 0
  %281 = vmatpush1.bf16.msra.mxu0 %v214
  %282 = vmatprep.subr.bf16.mxu0 0
  %283 = vmatpush1.bf16.msra.mxu0 %v215
  %284 = vmatprep.subr.bf16.mxu0 0
  %285 = vmatpush1.bf16.msra.mxu0 %v216
  %286 = vmatprep.subr.bf16.mxu0 0
  %287 = vmatpush1.bf16.msra.mxu0 %v217
  %288 = vmatprep.subr.bf16.mxu0 0
  %289 = vmatpush1.bf16.msra.mxu0 %v218
  %290 = vmatprep.subr.bf16.mxu0 0
  %291 = vmatpush1.bf16.msra.mxu0 0
  %292 = vmatprep.subr.bf16.mxu0 0
  %293 = vmatpush1.bf16.msra.mxu0 0
  %294 = vmatprep.subr.bf16.mxu0 0
  %295 = vmatpush1.bf16.msra.mxu0 0
  %296 = vmatprep.subr.bf16.mxu0 0
  %297 = vmatpush1.bf16.msra.mxu0 0
  %298 = vmatprep.subr.bf16.mxu0 0
  %299 = vmatpush1.bf16.msra.mxu0 0
  %300 = vmatprep.subr.bf16.mxu0 0
  %301 = vmatpush1.bf16.msra.mxu0 0
  %302 = vmatprep.subr.bf16.mxu0 0
  %303 = vmatpush1.bf16.msra.mxu0 0
  %304 = vmatprep.subr.bf16.mxu0 0
  %305 = vmatpush1.bf16.msra.mxu0 0
  %306 = vmatprep.mubr.bf16.mxu0 0
  %307 = vmatmul.mubr.bf16.gmra.mrb[0].mxu0 %v258
  %v308 = vpop.f32.mrb[0].mxu0
  %v309 = vadd.f32 %v224, %v308
  %v310 = vpop.f32.mrb[0].mxu0
  %v311 = vpop.f32.mrb[0].mxu0
  %v312 = vadd.f32 %v224, %v311
  %v313 = vpop.f32.mrb[0].mxu0
  %314 = vmatprep.mubr.bf16.mxu0 0
  %315 = vmatmul.mubr.bf16.gmra.mrb[0].mxu0 %v259
  %v316 = vpop.f32.mrb[0].mxu0
  %v317 = vadd.f32 %v224, %v316
  %v318 = vpop.f32.mrb[0].mxu0
  %v319 = vpop.f32.mrb[0].mxu0
  %v320 = vadd.f32 %v224, %v319
  %v321 = vpop.f32.mrb[0].mxu0
  %322 = vmatprep.mubr.bf16.mxu0 0
  %323 = vmatmul.mubr.bf16.gmra.mrb[0].mxu0 %v260
  %v324 = vpop.f32.mrb[0].mxu0
  %v325 = vadd.f32 %v224, %v324
  %v326 = vpop.f32.mrb[0].mxu0
  %v327 = vpop.f32.mrb[0].mxu0
  %v328 = vadd.f32 %v224, %v327
  %v329 = vpop.f32.mrb[0].mxu0
  %330 = vmatprep.mubr.bf16.mxu0 0
  %331 = vmatmul.mubr.bf16.gmra.mrb[0].mxu0 %v261
  %v332 = vpop.f32.mrb[0].mxu0
  %v333 = vadd.f32 %v224, %v332
  %v334 = vpop.f32.mrb[0].mxu0
  %v335 = vpop.f32.mrb[0].mxu0
  %v336 = vadd.f32 %v224, %v335
  %v337 = vpop.f32.mrb[0].mxu0
  %338 = vmatprep.mubr.bf16.mxu0 0
  %339 = vmatmul.mubr.bf16.gmra.mrb[0].mxu0 %v262
  %v340 = vpop.f32.mrb[0].mxu0
  %v341 = vadd.f32 %v224, %v340
  %v342 = vpop.f32.mrb[0].mxu0
  %v343 = vpop.f32.mrb[0].mxu0
  %v344 = vadd.f32 %v224, %v343
  %v345 = vpop.f32.mrb[0].mxu0
  %346 = vmatprep.mubr.bf16.mxu0 0
  %347 = vmatmul.mubr.bf16.gmra.mrb[0].mxu0 %v263
  %v348 = vpop.f32.mrb[0].mxu0
  %v349 = vadd.f32 %v224, %v348
  %v350 = vpop.f32.mrb[0].mxu0
  %v351 = vpop.f32.mrb[0].mxu0
  %v352 = vadd.f32 %v224, %v351
  %v353 = vpop.f32.mrb[0].mxu0
  %354 = vmatprep.mubr.bf16.mxu0 0
  %355 = vmatmul.mubr.bf16.gmra.mrb[0].mxu0 %v264
  %v356 = vpop.f32.mrb[0].mxu0
  %v357 = vadd.f32 %v224, %v356
  %v358 = vpop.f32.mrb[0].mxu0
  %v359 = vpop.f32.mrb[0].mxu0
  %v360 = vadd.f32 %v224, %v359
  %v361 = vpop.f32.mrb[0].mxu0
  %362 = vmatprep.mubr.bf16.mxu0 0
  %363 = vmatmul.mubr.bf16.gmra.mrb[0].mxu0 %v265
  %v364 = vpop.f32.mrb[0].mxu0
  %v365 = vadd.f32 %v224, %v364
  %v366 = vpop.f32.mrb[0].mxu0
  %v367 = vpop.f32.mrb[0].mxu0
  %v368 = vadd.f32 %v224, %v367
  %v369 = vpop.f32.mrb[0].mxu0
  %370 = vdwg.mxu0
  %371 = vst [vmem:[%s4] sm:$0xff] %v309
  %372 = vst [vmem:[%s4 + $0x8] sm:$0xff] %v312
  %373 = vst [vmem:[%s4 + $0x10] sm:$0xff] %v317
  %374 = vst [vmem:[%s4 + $0x18] sm:$0xff] %v320
  %375 = vst [vmem:[%s4 + $0x20] sm:$0xff] %v325
  %376 = vst [vmem:[%s4 + $0x28] sm:$0xff] %v328
  %377 = vst [vmem:[%s4 + $0x30] sm:$0xff] %v333
  %378 = vst [vmem:[%s4 + $0x38] sm:$0xff] %v336
  %379 = vst [vmem:[%s4 + $0x40] sm:$0xff] %v341
  %380 = vst [vmem:[%s4 + $0x48] sm:$0xff] %v344
  %381 = vst [vmem:[%s4 + $0x50] sm:$0xff] %v349
  %382 = vst [vmem:[%s4 + $0x58] sm:$0xff] %v352
  %383 = vst [vmem:[%s4 + $0x60] sm:$0xff] %v357
  %384 = vst [vmem:[%s4 + $0x68] sm:$0xff] %v360
  %385 = vst [vmem:[%s4 + $0x70] sm:$0xff] %v365
  %386 = vst [vmem:[%s4 + $0x78] sm:$0xff] %v368
  // Predicated region
  $region18: #{encoder_forward.3} parent=0 // pred_check
    _
  $region19: #{encoder_forward.3} parent=0 // pred_check_branch
    %388 = sbr.rel (0) target = $region21
  $region20: #{encoder_forward.3} parent=0 // pred_region
    _
  $region21: #{encoder_forward.3} parent=0 // pred_fallthru
    _
  // Predicated region
  $region22: #{encoder_forward.3} parent=0 // pred_check
    _
  $region23: #{encoder_forward.3} parent=0 // pred_check_branch
    %390 = sbr.rel (0) target = $region25
  $region24: #{encoder_forward.3} parent=0 // pred_region
    _
  $region25: #{encoder_forward.3} parent=0 // pred_fallthru
    _

</llo_original>
